<compile_context>
chip_gen: v5e
topology: v5e:2x2
jax: 0.10.0
libtpu: 0.0.40
codegen_flags: <defaults>
</compile_context>

<pallas_src>
import math
import functools

import jax
import jax.numpy as jnp
from jax.experimental import pallas as pl
from jax.experimental.pallas import tpu as pltpu


def _bert_embedding_kernel(ids_ref, pos_ref, tok_hbm, out_ref, tok_buf, sems,
                           *, scale, tl, n_sems, seq_len, vocab):
    """One grid step: gather `tl` token rows from HBM, scale, add positions.

    ids_ref : (B*L,) int32 in SMEM (scalar prefetch), flat token ids.
    pos_ref : (tl, E)  positional-embedding slab for this L-tile (VMEM).
    tok_hbm : (V, E)   token embedding table, left in HBM (memory_space=ANY).
    out_ref : (tl, E)  output slab for (batch b, L-tile t) (VMEM).
    tok_buf : (tl, E)  VMEM scratch holding the gathered token rows.
    sems    : (n_sems,) DMA semaphores -> up to n_sems row copies in flight.
    """
    t = pl.program_id(0)            # L-tile index (outer grid axis)
    b = pl.program_id(1)            # batch index  (inner grid axis)
    base = b * seq_len + t * tl     # flat offset of this tile's first token

    def row_id(r):
        # Clamp guards an out-of-range token id from driving an OOB HBM DMA.
        return jnp.clip(ids_ref[base + r], 0, vocab - 1)

    def start_row(r):
        pltpu.make_async_copy(
            tok_hbm.at[pl.ds(row_id(r), 1)],
            tok_buf.at[pl.ds(r, 1)],
            sems.at[r % n_sems],
        ).start()

    def wait_row(r):
        # Source index is irrelevant for wait(); only the copy shape matters.
        pltpu.make_async_copy(
            tok_hbm.at[pl.ds(0, 1)],
            tok_buf.at[pl.ds(r, 1)],
            sems.at[r % n_sems],
        ).wait()

    # Prime the gather pipeline with up to n_sems outstanding row DMAs.
    @pl.loop(0, n_sems)
    def _prime(r):
        start_row(r)

    # Drain: as each row lands, immediately launch the next row on its sem.
    @pl.loop(0, tl)
    def _drain(r):
        wait_row(r)

        @pl.when(r + n_sems < tl)
        def _():
            start_row(r + n_sems)

    # FMA in f32 on every generation (v5e VPU has no bf16 ALU); cast at store.
    tok = tok_buf[...].astype(jnp.float32)
    pos = pos_ref[...].astype(jnp.float32)
    out_ref[...] = (tok * scale + pos).astype(out_ref.dtype)
    # TODO(synk): nn.Dropout(p=0.1) is treated as eval-mode identity (training
    # dropout would need pltpu.prng_* and is not bit-reproducible vs torch).


def bert_embedding(ids, token_table, pos_table, *, tile_l=None, n_sems=8,
                   out_dtype=None):
    """ids (B, L) int32; token_table (V, E); pos_table (MAX_LEN, E)."""
    B, L = ids.shape
    V, E = token_table.shape
    max_len = pos_table.shape[0]
    assert L <= max_len, f"sequence length {L} exceeds positional table {max_len}"
    assert pos_table.shape[1] == E

    if out_dtype is None:
        out_dtype = token_table.dtype   # keep module semantics (f32 by default)

    if tile_l is None:
        # Biggest sublane-aligned tile that divides L, capped at 512 rows.
        tile_l = L
        for cand in (512, 256, 128, 64, 32, 16, 8):
            if L % cand == 0:
                tile_l = cand
                break
    assert L % tile_l == 0
    n_sems = max(1, min(n_sems, tile_l))

    scale = math.sqrt(float(E))
    kernel = functools.partial(
        _bert_embedding_kernel,
        scale=scale, tl=tile_l, n_sems=n_sems, seq_len=L, vocab=V)

    grid = (L // tile_l, B)   # t outer, b inner: pos tile is reused across b

    return pl.pallas_call(
        kernel,
        out_shape=jax.ShapeDtypeStruct((B, L, E), out_dtype),
        grid_spec=pltpu.PrefetchScalarGridSpec(
            num_scalar_prefetch=1,        # flat ids land in SMEM, drive gather
            grid=grid,
            in_specs=[
                # (tile_l, E) slab of the positional table; its block index is
                # constant across the inner batch axis, so no repeated DMA.
                pl.BlockSpec((tile_l, E), lambda t, b, ids: (t, 0)),
                # Token table stays in HBM; rows are gathered via manual DMA.
                pl.BlockSpec(memory_space=pl.ANY),
            ],
            out_specs=pl.BlockSpec((pl.Squeezed(), tile_l, E),
                                   lambda t, b, ids: (b, t, 0)),
            scratch_shapes=[
                pltpu.VMEM((tile_l, E), token_table.dtype),
                pltpu.SemaphoreType.DMA((n_sems,)),
            ],
        ),
        compiler_params=pltpu.CompilerParams(
            dimension_semantics=("parallel", "parallel")),
    )(ids.reshape(-1).astype(jnp.int32), pos_table[:L], token_table)


def make_sinusoidal_pe(max_len, d_model):
    """Standard BERT/transformer trigonometric positional embedding table."""
    pos = jnp.arange(max_len, dtype=jnp.float32)[:, None]
    div = jnp.exp(
        jnp.arange(0, d_model, 2, dtype=jnp.float32)
        * (-math.log(10000.0) / d_model)
    )
    pe = jnp.zeros((max_len, d_model), jnp.float32)
    pe = pe.at[:, 0::2].set(jnp.sin(pos * div))
    pe = pe.at[:, 1::2].set(jnp.cos(pos * div))
    return pe


if __name__ == "__main__":
    # Small shapes consistent with the module's forward (E kept lane-dense).
    B, L, E, V, MAX_LEN = 2, 16, 128, 64, 32

    key = jax.random.PRNGKey(0)
    k_tok, k_ids = jax.random.split(key)

    # Deterministic "parameters": token embedding table (padding_idx=0 row
    # zeroed, as nn.Embedding(padding_idx=0) does) and the sinusoidal PE buffer.
    token_table = jax.random.normal(k_tok, (V, E), jnp.float32) * 0.02
    token_table = token_table.at[0].set(0.0)
    pos_table = make_sinusoidal_pe(MAX_LEN, E)

    # Input: sequence of token ids (seq == ts path of forward).
    ids = jax.random.randint(k_ids, (B, L), 0, V, dtype=jnp.int32)

    out = bert_embedding(ids, token_table, pos_table)
    out = jax.block_until_ready(out)

    # Pure-JAX reference of the forward pass (eval-mode dropout = identity).
    ref = token_table[ids] * math.sqrt(float(E)) + pos_table[:L][None, :, :]
    assert out.shape == (B, L, E) and out.dtype == jnp.float32
    assert jnp.allclose(out, ref, atol=1e-5), "kernel output mismatch vs reference"

    print("KERNEL_OK")
</pallas_src>

<mosaic_0001>
module attributes {stable_mosaic.version = 11 : i64} {
  func.func @_bert_embedding_kernel(%arg0: i32, %arg1: i32, %arg2: memref<32xi32, #tpu.memory_space<smem>>, %arg3: memref<16x128xf32, #tpu.memory_space<vmem>>, %arg4: memref<64x128xf32, #tpu.memory_space<any>>, %arg5: memref<1x16x128xf32, #tpu.memory_space<vmem>>, %arg6: memref<16x128xf32, #tpu.memory_space<vmem>>, %arg7: memref<8x!tpu.dma_semaphore, #tpu.memory_space<semaphore_mem>>) attributes {dimension_semantics = [#tpu.dimension_semantics<parallel>, #tpu.dimension_semantics<parallel>], iteration_bounds = array<i64: 1, 2>, scalar_prefetch = 1 : i64, scratch_operands = 2 : i64, tpu.core_type = #tpu.core_type<tc>, window_params = [{transform_indices = @transform_0, window_bounds = array<i64: 16, 128>}, {}, {transform_indices = @transform_2, window_bounds = array<i64: 1, 16, 128>}]} {
    %c16_i32 = arith.constant 16 : i32
    %0 = arith.muli %arg1, %c16_i32 : i32
    %c16_i32_0 = arith.constant 16 : i32
    %1 = arith.muli %arg0, %c16_i32_0 : i32
    %2 = arith.addi %0, %1 : i32
    %c0_i32 = arith.constant 0 : i32
    %c8_i32 = arith.constant 8 : i32
    %3 = arith.addi %c0_i32, %c8_i32 : i32
    %c1_i32 = arith.constant 1 : i32
    scf.for %arg8 = %c0_i32 to %3 step %c1_i32  : i32 {
      %c1_i32_12 = arith.constant 1 : i32
      %13 = arith.muli %arg8, %c1_i32_12 : i32
      %c0_i32_13 = arith.constant 0 : i32
      %14 = arith.addi %c0_i32_13, %13 : i32
      %15 = arith.addi %2, %14 : i32
      %16 = arith.index_cast %15 : i32 to index
      %17 = memref.load %arg2[%16] : memref<32xi32, #tpu.memory_space<smem>>
      %c0_i32_14 = arith.constant 0 : i32
      %c63_i32 = arith.constant 63 : i32
      %18 = arith.maxsi %c0_i32_14, %17 : i32
      %19 = arith.minsi %c63_i32, %18 : i32
      %c8_i32_15 = arith.constant 8 : i32
      %c0_i32_16 = arith.constant 0 : i32
      %20 = arith.cmpi eq, %c8_i32_15, %c0_i32_16 : i32
      %c1_i32_17 = arith.constant 1 : i32
      %21 = arith.select %20, %c1_i32_17, %c8_i32_15 : i32
      %22 = arith.remsi %14, %21 : i32
      %c0_i32_18 = arith.constant 0 : i32
      %23 = arith.cmpi ne, %22, %c0_i32_18 : i32
      %c0_i32_19 = arith.constant 0 : i32
      %24 = arith.cmpi slt, %22, %c0_i32_19 : i32
      %c0_i32_20 = arith.constant 0 : i32
      %25 = arith.cmpi slt, %21, %c0_i32_20 : i32
      %26 = arith.xori %24, %25 : i1
      %27 = arith.andi %26, %23 : i1
      %28 = arith.addi %22, %21 : i32
      %29 = arith.select %27, %28, %22 : i32
      %c0_i32_21 = arith.constant 0 : i32
      %30 = tpu.memref_slice %arg4[%19, %c0_i32_21] : memref<64x128xf32, #tpu.memory_space<any>> -> memref<1x128xf32, #tpu.memory_space<any>>
      %c0_i32_22 = arith.constant 0 : i32
      %31 = tpu.memref_slice %arg6[%14, %c0_i32_22] : memref<16x128xf32, #tpu.memory_space<vmem>> -> memref<1x128xf32, #tpu.memory_space<vmem>>
      %32 = tpu.memref_slice %arg7[%29] : memref<8x!tpu.dma_semaphore, #tpu.memory_space<semaphore_mem>> -> memref<1x!tpu.dma_semaphore, #tpu.memory_space<semaphore_mem>>
      %33 = tpu.memref_squeeze %32 : memref<1x!tpu.dma_semaphore, #tpu.memory_space<semaphore_mem>> -> memref<!tpu.dma_semaphore, #tpu.memory_space<semaphore_mem>>
      tpu.enqueue_dma source(%30 : memref<1x128xf32, #tpu.memory_space<any>>) target(%31 : memref<1x128xf32, #tpu.memory_space<vmem>>) target_semaphore(%33 : memref<!tpu.dma_semaphore, #tpu.memory_space<semaphore_mem>>)
    }
    %c8_i32_1 = arith.constant 8 : i32
    %c0_i32_2 = arith.constant 0 : i32
    %c16_i32_3 = arith.constant 16 : i32
    %4 = arith.addi %c0_i32_2, %c16_i32_3 : i32
    %c1_i32_4 = arith.constant 1 : i32
    scf.for %arg8 = %c0_i32_2 to %4 step %c1_i32_4  : i32 {
      %c1_i32_12 = arith.constant 1 : i32
      %13 = arith.muli %arg8, %c1_i32_12 : i32
      %c0_i32_13 = arith.constant 0 : i32
      %14 = arith.addi %c0_i32_13, %13 : i32
      %c8_i32_14 = arith.constant 8 : i32
      %c0_i32_15 = arith.constant 0 : i32
      %15 = arith.cmpi eq, %c8_i32_14, %c0_i32_15 : i32
      %c1_i32_16 = arith.constant 1 : i32
      %16 = arith.select %15, %c1_i32_16, %c8_i32_14 : i32
      %17 = arith.remsi %14, %16 : i32
      %c0_i32_17 = arith.constant 0 : i32
      %18 = arith.cmpi ne, %17, %c0_i32_17 : i32
      %c0_i32_18 = arith.constant 0 : i32
      %19 = arith.cmpi slt, %17, %c0_i32_18 : i32
      %c0_i32_19 = arith.constant 0 : i32
      %20 = arith.cmpi slt, %16, %c0_i32_19 : i32
      %21 = arith.xori %19, %20 : i1
      %22 = arith.andi %21, %18 : i1
      %23 = arith.addi %17, %16 : i32
      %24 = arith.select %22, %23, %17 : i32
      %c0_i32_20 = arith.constant 0 : i32
      %c0_i32_21 = arith.constant 0 : i32
      %25 = tpu.memref_slice %arg4[%c0_i32_20, %c0_i32_21] : memref<64x128xf32, #tpu.memory_space<any>> -> memref<1x128xf32, #tpu.memory_space<any>>
      %c0_i32_22 = arith.constant 0 : i32
      %26 = tpu.memref_slice %arg6[%14, %c0_i32_22] : memref<16x128xf32, #tpu.memory_space<vmem>> -> memref<1x128xf32, #tpu.memory_space<vmem>>
      %27 = tpu.memref_slice %arg7[%24] : memref<8x!tpu.dma_semaphore, #tpu.memory_space<semaphore_mem>> -> memref<1x!tpu.dma_semaphore, #tpu.memory_space<semaphore_mem>>
      %28 = tpu.memref_squeeze %27 : memref<1x!tpu.dma_semaphore, #tpu.memory_space<semaphore_mem>> -> memref<!tpu.dma_semaphore, #tpu.memory_space<semaphore_mem>>
      tpu.wait_dma2 semaphore(%28 : memref<!tpu.dma_semaphore, #tpu.memory_space<semaphore_mem>>) src(%25 : memref<1x128xf32, #tpu.memory_space<any>>) dst(%26 : memref<1x128xf32, #tpu.memory_space<vmem>>)
      %c8_i32_23 = arith.constant 8 : i32
      %29 = arith.addi %14, %c8_i32_23 : i32
      %c16_i32_24 = arith.constant 16 : i32
      %30 = arith.cmpi slt, %29, %c16_i32_24 : i32
      %31 = arith.extui %30 : i1 to i32
      %c0_i32_25 = arith.constant 0 : i32
      %32 = arith.cmpi ne, %31, %c0_i32_25 : i32
      scf.if %32 {
        %c8_i32_26 = arith.constant 8 : i32
        %33 = arith.addi %14, %c8_i32_26 : i32
        %34 = arith.addi %2, %33 : i32
        %35 = arith.index_cast %34 : i32 to index
        %36 = memref.load %arg2[%35] : memref<32xi32, #tpu.memory_space<smem>>
        %c0_i32_27 = arith.constant 0 : i32
        %c63_i32 = arith.constant 63 : i32
        %37 = arith.maxsi %c0_i32_27, %36 : i32
        %38 = arith.minsi %c63_i32, %37 : i32
        %c8_i32_28 = arith.constant 8 : i32
        %c0_i32_29 = arith.constant 0 : i32
        %39 = arith.cmpi eq, %c8_i32_28, %c0_i32_29 : i32
        %c1_i32_30 = arith.constant 1 : i32
        %40 = arith.select %39, %c1_i32_30, %c8_i32_28 : i32
        %41 = arith.remsi %33, %40 : i32
        %c0_i32_31 = arith.constant 0 : i32
        %42 = arith.cmpi ne, %41, %c0_i32_31 : i32
        %c0_i32_32 = arith.constant 0 : i32
        %43 = arith.cmpi slt, %41, %c0_i32_32 : i32
        %c0_i32_33 = arith.constant 0 : i32
        %44 = arith.cmpi slt, %40, %c0_i32_33 : i32
        %45 = arith.xori %43, %44 : i1
        %46 = arith.andi %45, %42 : i1
        %47 = arith.addi %41, %40 : i32
        %48 = arith.select %46, %47, %41 : i32
        %c0_i32_34 = arith.constant 0 : i32
        %49 = tpu.memref_slice %arg4[%38, %c0_i32_34] : memref<64x128xf32, #tpu.memory_space<any>> -> memref<1x128xf32, #tpu.memory_space<any>>
        %c0_i32_35 = arith.constant 0 : i32
        %50 = tpu.memref_slice %arg6[%33, %c0_i32_35] : memref<16x128xf32, #tpu.memory_space<vmem>> -> memref<1x128xf32, #tpu.memory_space<vmem>>
        %51 = tpu.memref_slice %arg7[%48] : memref<8x!tpu.dma_semaphore, #tpu.memory_space<semaphore_mem>> -> memref<1x!tpu.dma_semaphore, #tpu.memory_space<semaphore_mem>>
        %52 = tpu.memref_squeeze %51 : memref<1x!tpu.dma_semaphore, #tpu.memory_space<semaphore_mem>> -> memref<!tpu.dma_semaphore, #tpu.memory_space<semaphore_mem>>
        tpu.enqueue_dma source(%49 : memref<1x128xf32, #tpu.memory_space<any>>) target(%50 : memref<1x128xf32, #tpu.memory_space<vmem>>) target_semaphore(%52 : memref<!tpu.dma_semaphore, #tpu.memory_space<semaphore_mem>>)
      } else {
      }
    }
    %c16_i32_5 = arith.constant 16 : i32
    %c0 = arith.constant 0 : index
    %c0_6 = arith.constant 0 : index
    %5 = vector.load %arg6[%c0, %c0_6] : memref<16x128xf32, #tpu.memory_space<vmem>>, vector<16x128xf32>
    %c0_7 = arith.constant 0 : index
    %c0_8 = arith.constant 0 : index
    %6 = vector.load %arg3[%c0_7, %c0_8] : memref<16x128xf32, #tpu.memory_space<vmem>>, vector<16x128xf32>
    %cst = arith.constant 11.3137083 : f32
    %7 = vector.broadcast %cst : f32 to vector<16x128xf32>
    %8 = arith.mulf %5, %7 : vector<16x128xf32>
    %9 = arith.addf %8, %6 : vector<16x128xf32>
    %c0_9 = arith.constant 0 : index
    %c0_10 = arith.constant 0 : index
    %c0_11 = arith.constant 0 : index
    %10 = vector.load %arg5[%c0_9, %c0_10, %c0_11] : memref<1x16x128xf32, #tpu.memory_space<vmem>>, vector<1x16x128xf32>
    %11 = vector.shape_cast %10 : vector<1x16x128xf32> to vector<16x128xf32>
    %12 = vector.shape_cast %9 : vector<16x128xf32> to vector<1x16x128xf32>
    tpu.vector_store %arg5[%c0_9, %c0_10, %c0_11], %12 {strides = array<i32>} : memref<1x16x128xf32, #tpu.memory_space<vmem>>, vector<1x16x128xf32>,
    return
  }
  func.func @transform_0(%arg0: i32, %arg1: i32, %arg2: memref<32xi32, #tpu.memory_space<smem>>) -> (i32, i32) {
    %c0_i32 = arith.constant 0 : i32
    %c0_i32_0 = arith.constant 0 : i32
    return %arg0, %c0_i32 : i32, i32
  }
  func.func @transform_2(%arg0: i32, %arg1: i32, %arg2: memref<32xi32, #tpu.memory_space<smem>>) -> (i32, i32, i32) {
    %c0_i32 = arith.constant 0 : i32
    %c0_i32_0 = arith.constant 0 : i32
    return %arg1, %arg0, %c0_i32 : i32, i32, i32
  }
}

</mosaic_0001>

<llo_original>
// kernel: tpu_custom_call.1
$region0: #{tpu_custom_call.1}
  #allocation0 [shape = 'u32[]', space=smem, size = 0x4, offset = 0x4, fixed_abs, tag = 'smem constant byte address 0x4 - core index']
  #allocation1 [shape = 'u32[72,128]{1,0:T(1,128)}', space=vmem, size = 0x9000, scoped, tag = 'internal scratch']
  #allocation2 [shape = 'f32[16,128]{1,0:T(8,128)}', space=vmem, size = 0x2000, scoped, tag = 'scratch operand']
  #allocation3 [shape = 's32[8]{0}', space=sflag, size = 0x20, scoped, tag = 'scratch operand']
  #allocation4 [shape = 's32[1]{0}', space=sflag, size = 0x4, scoped, tag = 'scoped memory for tpu_custom_call.1']
  #allocation5 [shape = 'u8[512]{0}', space=smem, size = 0x200, scoped, tag = 'prefetched SMEM operand 0']
  #allocation10 [shape = 's32[]', space=sflag, size = 0x4, offset = 0, fixed_abs, tag = 'sflag constant byte address 0x0 - dummy sync flag']
  #allocation11 [shape = 's32[]', space=sflag, size = 0x4, offset = 0, fixed_abs, tag = 'sflag constant byte address 0x0 - dummy sync flag']
  #allocation12 [shape = 'u32[]', space=smem, size = 0x4, offset = 0x44, fixed_abs, tag = 'smem constant byte address 0x44 - assertion arg 0']
  #allocation13 [shape = 'u32[]', space=smem, size = 0x4, offset = 0x48, fixed_abs, tag = 'smem constant byte address 0x48 - assertion arg 1']
  #allocation14 [shape = 's32[]', space=sflag, size = 0x4, offset = 0, fixed_abs, tag = 'sflag constant byte address 0x0 - dummy sync flag']
  #allocation15 [shape = 's32[]', space=sflag, size = 0x4, offset = 0, fixed_abs, tag = 'sflag constant byte address 0x0 - dummy sync flag']
  %s0 = inlined_call_operand.hbm [shape: s32[32], index: 0, kind: input, shape index: {}]
  %s1 = inlined_call_operand.hbm [shape: f32[16,128], index: 1, kind: input, shape index: {}]
  %s2 = inlined_call_operand.hbm [shape: f32[64,128], index: 2, kind: input, shape index: {}]
  %s3 = inlined_call_operand.hbm [shape: f32[2,16,128], index: 3, kind: output, shape index: {}]
  %s4 = sld [smem:[#allocation0]]
  $region67: #{tpu_custom_call.1} parent=0
    _
  %s6 = ssub.s32 1, %s4
  %s7 = scalar_select 0, %s6, %s4
  %s9 = sshll.u32 %s0, 4
  %s10 = int_to_ptr.hbm [resolvable:$true] %s9
  %12 = dma.hbm_to_smem %s10, 16, [#allocation5], [#allocation4]
  %14 = dma.done [#allocation4], 16
  %15 = sfence
  $region1: #{tpu_custom_call.1} parent=0
    #allocation6 [shape = 'u8[8192]{0}', space=vmem, size = 0x2000, scoped, tag = 'input window, operand 1, single buffered']
    #allocation7 [shape = 's32[2]{0}', space=sflag, size = 0x8, scoped, tag = 'scoped memory for tpu_custom_call.1']
    #allocation8 [shape = 's32[2]{0}', space=sflag, size = 0x8, scoped, tag = 'scoped memory for tpu_custom_call.1']
    #allocation9 [shape = 'u8[16384]{0}', space=vmem, size = 0x4000, scoped, tag = 'output window, operand 0']
    %16 = vsyncpa [#allocation7], 0
    %17 = vsyncpa [#allocation8], 0
    %s18 = scalar_lea.sflag [#allocation8], 1
    %19 = vsyncpa %s18, 0
    loop: start=0, step=1, limit=4
    $region2: #{tpu_custom_call.1} parent=1 // loop_pre_header
      _
    $region3: #{tpu_custom_call.1} parent=1 // loop_header
      %s21 = sphi 0, %s25
      %p22 = scmp.ge.s32.totalorder %s21, 4
      %s28 = sphi 0, %s40
      %s29 = sphi 0, %s36
      %s30 = sphi 0, %s28
      %s31 = sphi 0, %s29
      %s32 = sphi 0, %s30
      %s33 = sphi 0, %s31
      %s43 = sphi 0, %s45
      %s46 = sphi 0, %s43
      %s47 = sphi 0, %s46
      %s63 = sphi 0, %s47
      %s71 = sphi 0, %s73
      %s74 = sphi 0, %s71
      %s75 = sphi 0, %s74
      %s91 = sphi 0, %s75
    $region4: #{tpu_custom_call.1} parent=1 // loop_header_branch
      %24 = sbr.rel (%p22) target = $region8
    $region5: #{tpu_custom_call.1} parent=1 // loop_body
      %s26 = ssub.s32 %s21, 1
      %s27 = ssub.s32 %s21, 2
      %s34 = sadd.s32 1, %s29
      %p35 = scmp.ge.s32.totalorder %s34, 2
      %s36 = scalar_select %p35, 0, %s34
      %s37 = sadd.s32 1, %s28
      %s38 = scalar_select %p35, %s37, %s28
      %p39 = scmp.ge.s32.totalorder %s38, 1
      %s40 = scalar_select %p39, 0, %s38
      %s41 = ssub.s32 %s28, %s40
      %p42 = scmp.eq.s32.totalorder %s41, 0
      %s44 = sadd.s32 %s43, 1
      %s45 = scalar_select %p42, %s43, %s44
      %p48 = pneg %p42
      %p49 = scmp.eq.s32.totalorder %s21, 1
      %p50 = por %p48, %p49
      %p51 = scmp.ne.s32.totalorder %s43, %s46
      %p52 = scmp.eq.s32.totalorder %s21, 0
      %p53 = por %p51, %p52
      %p54 = scmp.ne.s32.totalorder %s43, %s46
      %p55 = scmp.eq.s32.totalorder %s26, 1
      %p56 = por %p54, %p55
      %p57 = scmp.ne.s32.totalorder %s46, %s47
      %p58 = scmp.eq.s32.totalorder %s26, 0
      %p59 = por %p57, %p58
      %p60 = scmp.ne.s32.totalorder %s46, %s47
      %p61 = scmp.eq.s32.totalorder %s27, 1
      %p62 = por %p60, %p61
      %p64 = scmp.ne.s32.totalorder %s47, %s63
      %p65 = scmp.eq.s32.totalorder %s27, 0
      %p66 = por %p64, %p65
      %s67 = ssub.s32 %s29, %s36
      %s68 = ssub.s32 %s28, %s40
      %s69 = sor.u32 %s67, %s68
      %p70 = scmp.eq.s32.totalorder %s69, 0
      %s72 = sadd.s32 %s71, 1
      %s73 = scalar_select %p70, %s71, %s72
      %p76 = pneg %p70
      %p77 = scmp.eq.s32.totalorder %s21, 1
      %p78 = por %p76, %p77
      %p79 = scmp.ne.s32.totalorder %s71, %s74
      %p80 = scmp.eq.s32.totalorder %s21, 0
      %p81 = por %p79, %p80
      %p82 = scmp.ne.s32.totalorder %s71, %s74
      %p83 = scmp.eq.s32.totalorder %s26, 1
      %p84 = por %p82, %p83
      %p85 = scmp.ne.s32.totalorder %s74, %s75
      %p86 = scmp.eq.s32.totalorder %s26, 0
      %p87 = por %p85, %p86
      %p88 = scmp.ne.s32.totalorder %s74, %s75
      %p89 = scmp.eq.s32.totalorder %s27, 1
      %p90 = por %p88, %p89
      %p92 = scmp.ne.s32.totalorder %s75, %s91
      %p93 = scmp.eq.s32.totalorder %s27, 0
      %p94 = por %p92, %p93
      %p95 = scmp.le.s32.totalorder 1, %s21
      %p96 = scmp.lt.s32.totalorder %s21, 3
      %p97 = pnand %p95, %p96
      %p98 = pneg %p97
      // Predicated region
      $region9: #{tpu_custom_call.1} parent=5 // pred_check
        _
      $region10: #{tpu_custom_call.1} parent=5 // pred_check_branch
        %100 = sbr.rel (%p97) target = $region12
      $region11: #{tpu_custom_call.1} parent=5 // pred_region
        %s101 = ssub.s32 %s21, 1
        // Predicated region
        $region13: #{tpu_custom_call.1} parent=11 // pred_check
          %p102 = pneg %p59
        $region14: #{tpu_custom_call.1} parent=11 // pred_check_branch
          %104 = sbr.rel (%p102) target = $region16
        $region15: #{tpu_custom_call.1} parent=11 // pred_region
          %s105 = smul.u32 2, %s30
          %107 = vsyncadd [#allocation7], 0
          %s108 = smul.addr %s105, 8
          %s109 = scalar_lea.hbm %s1, %s108
          %s110 = sshll.u32 %s109, 4
          %s111 = int_to_ptr.hbm [resolvable:$true] %s110
          %s112 = sshll.u32 [#allocation6], 4
          %s113 = int_to_ptr.vmem [resolvable:$true] %s112
          %118 = dma.hbm_to_vmem [thread:$0]  %s111, 256, %s113, [#allocation7], 128, 128, 8
        $region16: #{tpu_custom_call.1} parent=11 // pred_fallthru
          _
      $region12: #{tpu_custom_call.1} parent=5 // pred_fallthru
        _
      %p119 = scmp.lt.s32.totalorder %s21, 2
      // Predicated region
      $region17: #{tpu_custom_call.1} parent=5 // pred_check
        %p120 = pneg %p119
      $region18: #{tpu_custom_call.1} parent=5 // pred_check_branch
        %122 = sbr.rel (%p120) target = $region20
      $region19: #{tpu_custom_call.1} parent=5 // pred_region
        _
      $region20: #{tpu_custom_call.1} parent=5 // pred_fallthru
        _
      %p123 = scmp.le.s32.totalorder 1, %s21
      %p124 = scmp.lt.s32.totalorder %s21, 3
      %p125 = pnand %p123, %p124
      %p126 = pneg %p125
      // Predicated region
      $region21: #{tpu_custom_call.1} parent=5 // pred_check
        _
      $region22: #{tpu_custom_call.1} parent=5 // pred_check_branch
        %128 = sbr.rel (%p125) target = $region24
      $region23: #{tpu_custom_call.1} parent=5 // pred_region
        %s129 = ssub.s32 %s21, 1
        // Predicated region
        $region25: #{tpu_custom_call.1} parent=23 // pred_check
          %p130 = pneg %p59
        $region26: #{tpu_custom_call.1} parent=23 // pred_check_branch
          %132 = sbr.rel (%p130) target = $region28
        $region27: #{tpu_custom_call.1} parent=23 // pred_region
          %134 = dma.done [#allocation7], 256
        $region28: #{tpu_custom_call.1} parent=23 // pred_fallthru
          _
        %p135 = pneg %p59
        %p136 = pneg %p56
        %p137 = pneg %p87
        %p138 = pneg %p84
        %s139 = sand.u32 %s74, 1
        %s140 = scalar_lea.sflag [#allocation8], %s139
        %s141 = sand.u32 %s74, 1
        %s142 = smul.addr %s141, 16
        %s143 = scalar_lea.vmem [#allocation9], %s142
        %s144 = smul.u32 2, %s30
        %s145 = smul.u32 2, %s30
        %s146 = smul.u32 %s31, 16
        %s147 = smul.u32 %s30, 16
        %s148 = sadd.s32 %s146, %s147
        loop: start=0, step=1, limit=8
        $region29: #{tpu_custom_call.1} parent=23 // loop_pre_header
          _
        $region30: #{tpu_custom_call.1} parent=23 // loop_header
          %s150 = sphi 0, %s154
          %p151 = scmp.ge.s32.totalorder %s150, 8
        $region31: #{tpu_custom_call.1} parent=23 // loop_header_branch
          %153 = sbr.rel (%p151) target = $region35
        $region32: #{tpu_custom_call.1} parent=23 // loop_body
          %s155 = sadd.s32 %s148, %s150
          %s156 = sld [smem:[#allocation5 + %s155]]
          %p157 = scmp.gt.s32.totalorder %s156, 0
          %s158 = scalar_select %p157, %s156, 0
          %p159 = scmp.lt.s32.totalorder %s158, 63
          %s160 = scalar_select %p159, %s158, 63
          %p161 = scmp.lt.s32.totalorder %s150, 0
          %s162 = ssub.s32 0, %s150
          %s163 = scalar_select %p161, %s162, %s150
          %s164 = sand.u32 %s163, 7
          %s165 = ssub.s32 0, %s164
          %s166 = scalar_select %p161, %s165, %s164
          %p167 = scmp.ne.s32.totalorder %s166, 0
          %p168 = scmp.lt.s32.totalorder %s166, 0
          %p169 = pnand %p168, %p167
          %p170 = pneg %p169
          %s171 = sadd.s32 %s166, 8
          %s172 = scalar_select %p170, %s171, %s166
          %s173 = scalar_lea.hbm %s2, %s160
          %s174 = scalar_lea.vmem [#allocation2], %s150
          %s175 = scalar_lea.sflag [#allocation3], %s172
          // Predicated region
          $region36: #{tpu_custom_call.1} parent=32 // pred_check
            _
          $region37: #{tpu_custom_call.1} parent=32 // pred_check_branch
            %177 = sbr.rel target = $region39
          $region38: #{tpu_custom_call.1} parent=32 // pred_region
            %178 = sst [smem:[#allocation12]] [#allocation11]
            %179 = sst [smem:[#allocation13]] [#allocation10]
          $region39: #{tpu_custom_call.1} parent=32 // pred_fallthru
            _
          %181 = shalt.err (0)
          %s183 = sshll.u32 %s173, 4
          %s184 = int_to_ptr.hbm [resolvable:$true] %s183
          %s185 = sshll.u32 %s174, 4
          %s186 = int_to_ptr.vmem [resolvable:$true] %s185
          %188 = dma.hbm_to_vmem [thread:$0]  %s184, 16, %s186, %s175
        $region33: #{tpu_custom_call.1} parent=23 // loop_footer
          %s154 = sadd.s32 1, %s150
        $region34: #{tpu_custom_call.1} parent=23 // loop_footer_branch
          %149 = sbr.rel target = $region30
        $region35: #{tpu_custom_call.1} parent=23 // loop_exit
          _
        loop: start=0, step=1, limit=16
        $region40: #{tpu_custom_call.1} parent=23 // loop_pre_header
          _
        $region41: #{tpu_custom_call.1} parent=23 // loop_header
          %s190 = sphi 0, %s194
          %p191 = scmp.ge.s32.totalorder %s190, 16
        $region42: #{tpu_custom_call.1} parent=23 // loop_header_branch
          %193 = sbr.rel (%p191) target = $region46
        $region43: #{tpu_custom_call.1} parent=23 // loop_body
          %p195 = scmp.lt.s32.totalorder %s190, 0
          %s196 = ssub.s32 0, %s190
          %s197 = scalar_select %p195, %s196, %s190
          %s198 = sand.u32 %s197, 7
          %s199 = ssub.s32 0, %s198
          %s200 = scalar_select %p195, %s199, %s198
          %p201 = scmp.ne.s32.totalorder %s200, 0
          %p202 = scmp.lt.s32.totalorder %s200, 0
          %p203 = pnand %p202, %p201
          %p204 = pneg %p203
          %s205 = sadd.s32 %s200, 8
          %s206 = scalar_select %p204, %s205, %s200
          %s207 = scalar_lea.sflag [#allocation3], %s206
          %s208 = smul.u32 1, 1
          %s209 = sshll.u32 %s208, 4
          %210 = dma.done %s207, %s209
          %s211 = sadd.s32 %s190, 8
          %p212 = scmp.lt.s32.totalorder %s211, 16
          // Predicated region
          $region47: #{tpu_custom_call.1} parent=43 // pred_check
            %p213 = pneg %p212
          $region48: #{tpu_custom_call.1} parent=43 // pred_check_branch
            %215 = sbr.rel (%p213) target = $region50
          $region49: #{tpu_custom_call.1} parent=43 // pred_region
            %s216 = sadd.s32 %s148, %s211
            %s217 = sld [smem:[#allocation5 + %s216]]
            %p218 = scmp.gt.s32.totalorder %s217, 0
            %s219 = scalar_select %p218, %s217, 0
            %p220 = scmp.lt.s32.totalorder %s219, 63
            %s221 = scalar_select %p220, %s219, 63
            %p222 = scmp.lt.s32.totalorder %s211, 0
            %s223 = ssub.s32 0, %s211
            %s224 = scalar_select %p222, %s223, %s211
            %s225 = sand.u32 %s224, 7
            %s226 = ssub.s32 0, %s225
            %s227 = scalar_select %p222, %s226, %s225
            %p228 = scmp.ne.s32.totalorder %s227, 0
            %p229 = scmp.lt.s32.totalorder %s227, 0
            %p230 = pnand %p229, %p228
            %p231 = pneg %p230
            %s232 = sadd.s32 %s227, 8
            %s233 = scalar_select %p231, %s232, %s227
            %s234 = scalar_lea.hbm %s2, %s221
            %s235 = scalar_lea.vmem [#allocation2], %s211
            %s236 = scalar_lea.sflag [#allocation3], %s233
            // Predicated region
            $region51: #{tpu_custom_call.1} parent=49 // pred_check
              _
            $region52: #{tpu_custom_call.1} parent=49 // pred_check_branch
              %238 = sbr.rel target = $region54
            $region53: #{tpu_custom_call.1} parent=49 // pred_region
              %239 = sst [smem:[#allocation12]] [#allocation15]
              %240 = sst [smem:[#allocation13]] [#allocation14]
            $region54: #{tpu_custom_call.1} parent=49 // pred_fallthru
              _
            %242 = shalt.err (0)
            %s244 = sshll.u32 %s234, 4
            %s245 = int_to_ptr.hbm [resolvable:$true] %s244
            %s246 = sshll.u32 %s235, 4
            %s247 = int_to_ptr.vmem [resolvable:$true] %s246
            %249 = dma.hbm_to_vmem [thread:$0]  %s245, 16, %s247, %s236
          $region50: #{tpu_custom_call.1} parent=43 // pred_fallthru
            _
        $region44: #{tpu_custom_call.1} parent=23 // loop_footer
          %s194 = sadd.s32 1, %s190
        $region45: #{tpu_custom_call.1} parent=23 // loop_footer_branch
          %189 = sbr.rel target = $region41
        $region46: #{tpu_custom_call.1} parent=23 // loop_exit
          _
        %v250 = vld [vmem:[#allocation2] sm:$0xff]
        %v251 = vld [vmem:[#allocation2 + $0x8] sm:$0xff]
        %v252 = vld [vmem:[#allocation6] sm:$0xff]
        %v253 = vld [vmem:[#allocation6 + $0x8] sm:$0xff]
        %v254 = vmul.f32 %v250, 11.313708
        %v255 = vmul.f32 %v251, 11.313708
        %v256 = vadd.f32 %v254, %v252
        %v257 = vadd.f32 %v255, %v253
        %258 = vst [vmem:[%s143] sm:$0xff] %v256
        %259 = vst [vmem:[%s143 + $0x8] sm:$0xff] %v257
        %s260 = sand.u32 %s74, 1
        %s261 = scalar_lea.sflag [#allocation8], %s260
        %s262 = sand.u32 %s74, 1
        %s263 = smul.addr %s262, 16
        %s264 = scalar_lea.vmem [#allocation9], %s263
        // Predicated region
        $region55: #{tpu_custom_call.1} parent=23 // pred_check
          %p265 = pneg %p84
        $region56: #{tpu_custom_call.1} parent=23 // pred_check_branch
          %267 = sbr.rel (%p265) target = $region58
        $region57: #{tpu_custom_call.1} parent=23 // pred_region
          %s268 = smul.u32 2, %s30
          %270 = vsyncadd %s261, 0
          %s271 = smul.addr %s31, 2
          %s272 = sadd.s32 %s268, %s271
          %s273 = smul.addr %s272, 8
          %s274 = scalar_lea.hbm %s3, %s273
          %s275 = sshll.u32 %s264, 4
          %s276 = int_to_ptr.vmem [resolvable:$true] %s275
          %s277 = sshll.u32 %s274, 4
          %s278 = int_to_ptr.hbm [resolvable:$true] %s277
          %283 = dma.vmem_to_hbm [thread:$0]  %s276, 256, %s278, %s261, 128, 128, 8
        $region58: #{tpu_custom_call.1} parent=23 // pred_fallthru
          _
      $region24: #{tpu_custom_call.1} parent=5 // pred_fallthru
        _
      %p284 = scmp.le.s32.totalorder 2, %s21
      // Predicated region
      $region59: #{tpu_custom_call.1} parent=5 // pred_check
        %p285 = pneg %p284
      $region60: #{tpu_custom_call.1} parent=5 // pred_check_branch
        %287 = sbr.rel (%p285) target = $region62
      $region61: #{tpu_custom_call.1} parent=5 // pred_region
        %s288 = ssub.s32 %s21, 2
        // Predicated region
        $region63: #{tpu_custom_call.1} parent=61 // pred_check
          %p289 = pneg %p90
        $region64: #{tpu_custom_call.1} parent=61 // pred_check_branch
          %291 = sbr.rel (%p289) target = $region66
        $region65: #{tpu_custom_call.1} parent=61 // pred_region
          %s292 = sand.u32 %s75, 1
          %s293 = scalar_lea.sflag [#allocation8], %s292
          %s294 = sand.u32 %s75, 1
          %s295 = smul.addr %s294, 16
          %s296 = scalar_lea.vmem [#allocation9], %s295
          %298 = dma.done %s293, 256
        $region66: #{tpu_custom_call.1} parent=61 // pred_fallthru
          _
      $region62: #{tpu_custom_call.1} parent=5 // pred_fallthru
        _
    $region6: #{tpu_custom_call.1} parent=1 // loop_footer
      %s25 = sadd.s32 1, %s21
    $region7: #{tpu_custom_call.1} parent=1 // loop_footer_branch
      %20 = sbr.rel target = $region3
    $region8: #{tpu_custom_call.1} parent=1 // loop_exit
      _
    %299 = vsyncpa [#allocation7], 1
    %s300 = scalar_lea.sflag [#allocation7], 1
    %301 = vsyncpa %s300, 1
    %302 = vsyncpa [#allocation8], 1
    %s303 = scalar_lea.sflag [#allocation8], 1
    %304 = vsyncpa %s303, 1
  %305 = vsyncmov [#allocation3]
  %s306 = vpop.sfrf %305
  %p307 = scmp.eq.s32.totalorder %s306, 0
  %p308 = pneg %p307
  %310 = shalt.err (%p308)
  %s311 = scalar_lea.sflag [#allocation3], 1
  %312 = vsyncmov %s311
  %s313 = vpop.sfrf %312
  %p314 = scmp.eq.s32.totalorder %s313, 0
  %p315 = pneg %p314
  %317 = shalt.err (%p315)
  %s318 = scalar_lea.sflag [#allocation3], 2
  %319 = vsyncmov %s318
  %s320 = vpop.sfrf %319
  %p321 = scmp.eq.s32.totalorder %s320, 0
  %p322 = pneg %p321
  %324 = shalt.err (%p322)
  %s325 = scalar_lea.sflag [#allocation3], 3
  %326 = vsyncmov %s325
  %s327 = vpop.sfrf %326
  %p328 = scmp.eq.s32.totalorder %s327, 0
  %p329 = pneg %p328
  %331 = shalt.err (%p329)
  %s332 = scalar_lea.sflag [#allocation3], 4
  %333 = vsyncmov %s332
  %s334 = vpop.sfrf %333
  %p335 = scmp.eq.s32.totalorder %s334, 0
  %p336 = pneg %p335
  %338 = shalt.err (%p336)
  %s339 = scalar_lea.sflag [#allocation3], 5
  %340 = vsyncmov %s339
  %s341 = vpop.sfrf %340
  %p342 = scmp.eq.s32.totalorder %s341, 0
  %p343 = pneg %p342
  %345 = shalt.err (%p343)
  %s346 = scalar_lea.sflag [#allocation3], 6
  %347 = vsyncmov %s346
  %s348 = vpop.sfrf %347
  %p349 = scmp.eq.s32.totalorder %s348, 0
  %p350 = pneg %p349
  %352 = shalt.err (%p350)
  %s353 = scalar_lea.sflag [#allocation3], 7
  %354 = vsyncmov %s353
  %s355 = vpop.sfrf %354
  %p356 = scmp.eq.s32.totalorder %s355, 0
  %p357 = pneg %p356
  %359 = shalt.err (%p357)

</llo_original>
